<compile_context>
chip_gen: v6e
topology: v6e:2x2x1
jax: 0.10.0
libtpu: 0.0.40
codegen_flags: <defaults>
</compile_context>

<pallas_src>
import functools

import jax
import jax.numpy as jnp
from jax.experimental import pallas as pl
from jax.experimental.pallas import tpu as pltpu


def _addcoords_kernel(x_ref, o_ref, *, C, W, sx, sy, with_r):
    # x_ref: (Bt, C, TS)      — batch sub-block, all input channels, one tile
    # o_ref: (Bt, C_out, TS)  — same tile of the concatenated output
    # TS is a lane-dense tile of the row-major flattened (H, W) spatial extent.
    bt, c_out, ts = o_ref.shape
    n_coord = c_out - C

    # 1) Pass-through of the input channels (lane-dense whole-slice store).
    o_ref[:, 0:C, :] = x_ref[...]

    # 2) Coord channels from the flat spatial index p = s*ts + i, decomposed
    #    as h = p // W, w = p % W. Tile start decomposed with exact scalar
    #    integer math; in-tile offsets via f32 estimate + exact +-1 correction
    #    (q < ts + W << 2**23, so every quantity below is exact in f32).
    s = pl.program_id(1)
    start = s * ts
    h0 = jax.lax.div(start, jnp.int32(W))          # scalar, exact (start >= 0)
    r0 = jax.lax.rem(start, jnp.int32(W))          # scalar, exact

    q = jax.lax.broadcasted_iota(jnp.int32, (1, 1, ts), 2) + r0
    qf = q.astype(jnp.float32)
    wf = float(W)
    d = jnp.floor((qf + 0.5) * (1.0 / W))          # approx q // W
    d = jnp.where(d * wf > qf, d - 1.0, d)         # exact +-1 correction
    d = jnp.where((d + 1.0) * wf <= qf, d + 1.0, d)
    w = qf - d * wf                                # exact q % W
    h = d + h0.astype(jnp.float32)

    xx = h * sx - 1.0          # varies along H (x_dim), in [-1, 1]
    yy = w * sy - 1.0          # varies along W (y_dim), in [-1, 1]

    ch = jax.lax.broadcasted_iota(jnp.int32, (1, n_coord, ts), 1)
    if with_r:
        rr = jnp.sqrt((xx - 0.5) ** 2 + (yy - 0.5) ** 2)
        coords = jnp.where(ch == 0, xx, jnp.where(ch == 1, yy, rr))
    else:
        coords = jnp.where(ch == 0, xx, yy)

    # Single coalesced store of all coord channels (batch-invariant broadcast).
    o_ref[:, C:, :] = jnp.broadcast_to(coords.astype(o_ref.dtype),
                                       (bt, n_coord, ts))


# 65536 deliberately left out: sublane-1 coord temporaries pad 8x in VMEM and
# 32768-lane tiles already carry multi-MiB per-step transfers.
_LANE_TILE_CANDIDATES = (32768, 16384, 8192, 4096, 2048, 1024, 512, 256, 128)
_STEP_TARGET_BYTES = 4 * 1024 * 1024   # aim for >= ~4 MiB of HBM traffic / step
_BLOCK_CAP_BYTES = 8 * 1024 * 1024     # single-buffered in+out block cap


def _pick_tiling(B, HW, c_in, c_out, itemsize):
    """Choose (Bt, ts, n_spatial_tiles) for grid (B // Bt, n_spatial_tiles).

    Goals, in order: lane-dense tiles (multiple of 128 or full extent);
    >= ~4 MiB of HBM traffic per grid step (bigger spatial tile first, then
    batch sub-blocking); single-buffered in+out block <= 8 MiB so the
    double-buffered pipeline fits every generation's VMEM; and >= 2 grid
    points whenever the problem can be split (v7x has 2 TensorCores).
    """
    bytes_per_elem = (c_in + c_out) * itemsize     # read c_in + write c_out

    # ---- spatial (lane) tile ----
    if HW <= 128:
        ts = HW                                    # full-extent lane block
    else:
        max_ts = max(128,
                     min(_BLOCK_CAP_BYTES // bytes_per_elem, HW) // 128 * 128)
        exact = [c for c in _LANE_TILE_CANDIDATES
                 if c <= max_ts and HW % c == 0]
        if exact:
            ts = exact[0]
            if B == 1:
                # Keep >= 2 spatial tiles so both v7x TensorCores get work.
                multi = [c for c in exact if HW // c >= 2]
                if multi:
                    ts = multi[0]
        else:
            # HW not a multiple of 128: lane-dense tiles + masked boundary
            # tile via a cdiv grid (out-of-range lanes are not written back).
            ts = min(max_ts, (HW // 128) * 128)
    n_st = pl.cdiv(HW, ts)

    # ---- batch sub-blocking (coords are batch-invariant) ----
    bt = 1
    step_bytes = ts * bytes_per_elem
    if B > 1 and step_bytes < _STEP_TARGET_BYTES:
        want = min(B, max(1, _STEP_TARGET_BYTES // step_bytes))
        for d in range(want, 0, -1):
            if B % d == 0 and d * step_bytes <= _BLOCK_CAP_BYTES:
                bt = d
                break
    # Never collapse to a single grid point when the problem can be split:
    # with grid (1, 1) only one of v7x's two TensorCores does any work.
    if B > 1 and bt == B and n_st == 1:
        bt = next(d for d in range(B // 2, 0, -1) if B % d == 0)

    return bt, ts, n_st


def add_coords(x, with_r: bool = False):
    """Pallas implementation of AddCoords.forward. x: (B, C, H, W)."""
    B, C, H, W = x.shape
    n_coord = 3 if with_r else 2
    C_out = C + n_coord
    HW = H * W

    # Contiguous (free) reshape: lane dim becomes H*W -> lane-dense stores.
    x_flat = x.reshape(B, C, HW)

    bt, ts, n_st = _pick_tiling(B, HW, C, C_out, x.dtype.itemsize)
    nb = B // bt

    # Fold the 2/(dim-1) scale into compile-time constants; mimic torch's
    # 0/0 -> nan behaviour for degenerate H == 1 / W == 1.
    sx = (2.0 / (H - 1)) if H > 1 else float("nan")
    sy = (2.0 / (W - 1)) if W > 1 else float("nan")

    kernel = functools.partial(_addcoords_kernel, C=C, W=W, sx=sx, sy=sy,
                               with_r=with_r)

    # Raise the scoped-VMEM limit only when double-buffered blocks plus the
    # sublane-padded coord temporaries might not fit v5e's 16 MiB default;
    # cap the request at 48 MiB (< v7x's 64 MiB physical, leaves headroom).
    block_bytes = bt * (C + C_out) * ts * x.dtype.itemsize
    temp_bytes = (8 + 2 * bt) * 8 * ts * 4        # generous upper bound
    need = 2 * block_bytes + temp_bytes
    vmem_limit = None
    if need > 12 * 1024 * 1024:
        vmem_limit = min(48 * 1024 * 1024, max(32 * 1024 * 1024, 2 * need))

    out_flat = pl.pallas_call(
        kernel,
        out_shape=jax.ShapeDtypeStruct((B, C_out, HW), x.dtype),
        grid_spec=pltpu.PrefetchScalarGridSpec(
            num_scalar_prefetch=0,
            grid=(nb, n_st),
            in_specs=[pl.BlockSpec((bt, C, ts), lambda b, s: (b, 0, s))],
            out_specs=pl.BlockSpec((bt, C_out, ts), lambda b, s: (b, 0, s)),
        ),
        compiler_params=pltpu.CompilerParams(
            dimension_semantics=("parallel", "parallel"),
            vmem_limit_bytes=vmem_limit),
    )(x_flat)

    return out_flat.reshape(B, C_out, H, W)


def _reference(x, with_r: bool = False):
    B, C, H, W = x.shape
    xx = (2.0 * jnp.arange(H, dtype=jnp.float32) / (H - 1) - 1.0)
    yy = (2.0 * jnp.arange(W, dtype=jnp.float32) / (W - 1) - 1.0)
    xx = jnp.broadcast_to(xx[None, None, :, None], (B, 1, H, W)).astype(x.dtype)
    yy = jnp.broadcast_to(yy[None, None, None, :], (B, 1, H, W)).astype(x.dtype)
    parts = [x, xx, yy]
    if with_r:
        parts.append(jnp.sqrt((xx - 0.5) ** 2 + (yy - 0.5) ** 2))
    return jnp.concatenate(parts, axis=1)


if __name__ == "__main__":
    key = jax.random.PRNGKey(0)

    # Default config (with_r=False), matching AddCoords() default.
    B, C, H, W = 2, 4, 16, 16
    x = jax.random.normal(key, (B, C, H, W), dtype=jnp.float32)

    out = jax.block_until_ready(add_coords(x, with_r=False))
    ref = _reference(x, with_r=False)
    assert out.shape == (B, C + 2, H, W)
    assert jnp.allclose(out, ref, atol=1e-6), "mismatch vs reference (with_r=False)"

    # with_r=True path.
    out_r = jax.block_until_ready(add_coords(x, with_r=True))
    ref_r = _reference(x, with_r=True)
    assert out_r.shape == (B, C + 3, H, W)
    assert jnp.allclose(out_r, ref_r, atol=1e-6), "mismatch vs reference (with_r=True)"

    # Batch sub-blocking path (Bt > 1): spatial extent collapses to one tile,
    # so two batches are blocked per grid step (grid (2, 1), Bt = 2).
    xb4 = jax.random.normal(jax.random.PRNGKey(1), (4, 4, 16, 16), dtype=jnp.float32)
    out_b4 = jax.block_until_ready(add_coords(xb4, with_r=False))
    assert jnp.allclose(out_b4, _reference(xb4, with_r=False), atol=1e-6), \
        "mismatch vs reference (batch-blocked)"

    # Non-square spatial dims with H*W not a multiple of 128: exercises the
    # cdiv grid with a lane-dense tile and a masked boundary tile at B == 1.
    xns = jax.random.normal(jax.random.PRNGKey(2), (1, 3, 8, 24), dtype=jnp.float32)
    out_ns = jax.block_until_ready(add_coords(xns, with_r=False))
    assert out_ns.shape == (1, 5, 8, 24)
    assert jnp.allclose(out_ns, _reference(xns, with_r=False), atol=1e-6), \
        "mismatch vs reference (non-square, masked tail)"

    print("KERNEL_OK")
</pallas_src>

<mosaic_0001>
module attributes {stable_mosaic.version = 11 : i64} {
  func.func @_addcoords_kernel(%arg0: i32, %arg1: i32, %arg2: memref<1x4x256xf32, #tpu.memory_space<vmem>>, %arg3: memref<1x6x256xf32, #tpu.memory_space<vmem>>) attributes {dimension_semantics = [#tpu.dimension_semantics<parallel>, #tpu.dimension_semantics<parallel>], iteration_bounds = array<i64: 2, 1>, scalar_prefetch = 0 : i64, scratch_operands = 0 : i64, tpu.core_type = #tpu.core_type<tc>, window_params = [{transform_indices = @transform_0, window_bounds = array<i64: 1, 4, 256>}, {transform_indices = @transform_1, window_bounds = array<i64: 1, 6, 256>}]} {
    %c0 = arith.constant 0 : index
    %c0_0 = arith.constant 0 : index
    %c0_1 = arith.constant 0 : index
    %0 = vector.load %arg2[%c0, %c0_0, %c0_1] : memref<1x4x256xf32, #tpu.memory_space<vmem>>, vector<1x4x256xf32>
    %c0_2 = arith.constant 0 : index
    %c0_3 = arith.constant 0 : index
    %c0_4 = arith.constant 0 : index
    %1 = vector.load %arg3[%c0_2, %c0_3, %c0_4] : memref<1x6x256xf32, #tpu.memory_space<vmem>>, vector<1x4x256xf32>
    tpu.vector_store %arg3[%c0_2, %c0_3, %c0_4], %0 {strides = array<i32>} : memref<1x6x256xf32, #tpu.memory_space<vmem>>, vector<1x4x256xf32>,
    %c256_i32 = arith.constant 256 : i32
    %2 = arith.muli %arg1, %c256_i32 : i32
    %c16_i32 = arith.constant 16 : i32
    %3 = arith.divsi %2, %c16_i32 : i32
    %c16_i32_5 = arith.constant 16 : i32
    %4 = arith.remsi %2, %c16_i32_5 : i32
    %5 = tpu.iota {dimensions = array<i32: 2>} : vector<1x1x256xi32>
    %6 = vector.broadcast %4 : i32 to vector<1x1x256xi32>
    %7 = arith.addi %5, %6 : vector<1x1x256xi32>
    %8 = arith.sitofp %7 : vector<1x1x256xi32> to vector<1x1x256xf32>
    %cst = arith.constant 5.000000e-01 : f32
    %9 = vector.broadcast %cst : f32 to vector<1x1x256xf32>
    %10 = arith.addf %8, %9 : vector<1x1x256xf32>
    %cst_6 = arith.constant 6.250000e-02 : f32
    %11 = vector.broadcast %cst_6 : f32 to vector<1x1x256xf32>
    %12 = arith.mulf %10, %11 : vector<1x1x256xf32>
    %13 = math.floor %12 : vector<1x1x256xf32>
    %cst_7 = arith.constant 1.600000e+01 : f32
    %14 = vector.broadcast %cst_7 : f32 to vector<1x1x256xf32>
    %15 = arith.mulf %13, %14 : vector<1x1x256xf32>
    %16 = arith.cmpf ogt, %15, %8 : vector<1x1x256xf32>
    %cst_8 = arith.constant 1.000000e+00 : f32
    %17 = vector.broadcast %cst_8 : f32 to vector<1x1x256xf32>
    %18 = arith.subf %13, %17 : vector<1x1x256xf32>
    %19 = arith.select %16, %18, %13 : vector<1x1x256xi1>, vector<1x1x256xf32>
    %cst_9 = arith.constant 1.000000e+00 : f32
    %20 = vector.broadcast %cst_9 : f32 to vector<1x1x256xf32>
    %21 = arith.addf %19, %20 : vector<1x1x256xf32>
    %cst_10 = arith.constant 1.600000e+01 : f32
    %22 = vector.broadcast %cst_10 : f32 to vector<1x1x256xf32>
    %23 = arith.mulf %21, %22 : vector<1x1x256xf32>
    %24 = arith.cmpf ole, %23, %8 : vector<1x1x256xf32>
    %cst_11 = arith.constant 1.000000e+00 : f32
    %25 = vector.broadcast %cst_11 : f32 to vector<1x1x256xf32>
    %26 = arith.addf %19, %25 : vector<1x1x256xf32>
    %27 = arith.select %24, %26, %19 : vector<1x1x256xi1>, vector<1x1x256xf32>
    %cst_12 = arith.constant 1.600000e+01 : f32
    %28 = vector.broadcast %cst_12 : f32 to vector<1x1x256xf32>
    %29 = arith.mulf %27, %28 : vector<1x1x256xf32>
    %30 = arith.subf %8, %29 : vector<1x1x256xf32>
    %31 = arith.sitofp %3 : i32 to f32
    %32 = vector.broadcast %31 : f32 to vector<1x1x256xf32>
    %33 = arith.addf %27, %32 : vector<1x1x256xf32>
    %cst_13 = arith.constant 0.13333334 : f32
    %34 = vector.broadcast %cst_13 : f32 to vector<1x1x256xf32>
    %35 = arith.mulf %33, %34 : vector<1x1x256xf32>
    %cst_14 = arith.constant 1.000000e+00 : f32
    %36 = vector.broadcast %cst_14 : f32 to vector<1x1x256xf32>
    %37 = arith.subf %35, %36 : vector<1x1x256xf32>
    %cst_15 = arith.constant 0.13333334 : f32
    %38 = vector.broadcast %cst_15 : f32 to vector<1x1x256xf32>
    %39 = arith.mulf %30, %38 : vector<1x1x256xf32>
    %cst_16 = arith.constant 1.000000e+00 : f32
    %40 = vector.broadcast %cst_16 : f32 to vector<1x1x256xf32>
    %41 = arith.subf %39, %40 : vector<1x1x256xf32>
    %42 = tpu.iota {dimensions = array<i32: 1>} : vector<1x2x256xi32>
    %c0_i32 = arith.constant 0 : i32
    %43 = vector.broadcast %c0_i32 : i32 to vector<1x2x256xi32>
    %44 = arith.cmpi eq, %42, %43 : vector<1x2x256xi32>
    %45 = vector.shape_cast %37 : vector<1x1x256xf32> to vector<1x1x256xf32>
    %46 = vector.broadcast %45 : vector<1x1x256xf32> to vector<1x2x256xf32>
    %47 = vector.shape_cast %41 : vector<1x1x256xf32> to vector<1x1x256xf32>
    %48 = vector.broadcast %47 : vector<1x1x256xf32> to vector<1x2x256xf32>
    %49 = arith.select %44, %46, %48 : vector<1x2x256xi1>, vector<1x2x256xf32>
    %c0_17 = arith.constant 0 : index
    %c4 = arith.constant 4 : index
    %c0_18 = arith.constant 0 : index
    %50 = vector.load %arg3[%c0_17, %c4, %c0_18] : memref<1x6x256xf32, #tpu.memory_space<vmem>>, vector<1x2x256xf32>
    tpu.vector_store %arg3[%c0_17, %c4, %c0_18], %49 {strides = array<i32>} : memref<1x6x256xf32, #tpu.memory_space<vmem>>, vector<1x2x256xf32>,
    return
  }
  func.func @transform_0(%arg0: i32, %arg1: i32) -> (i32, i32, i32) {
    %c0_i32 = arith.constant 0 : i32
    %c0_i32_0 = arith.constant 0 : i32
    return %arg0, %c0_i32, %arg1 : i32, i32, i32
  }
  func.func @transform_1(%arg0: i32, %arg1: i32) -> (i32, i32, i32) {
    %c0_i32 = arith.constant 0 : i32
    %c0_i32_0 = arith.constant 0 : i32
    return %arg0, %c0_i32, %arg1 : i32, i32, i32
  }
}

</mosaic_0001>

<llo_original>
// kernel: tpu_custom_call.1
$region0: #{tpu_custom_call.1}
  #allocation0 [shape = 'u32[]', space=smem, size = 0x4, offset = 0x4, fixed_abs, tag = 'smem constant byte address 0x4 - core index']
  #allocation1 [shape = 'u32[144,128]{1,0:T(1,128)}', space=vmem, size = 0x12000, scoped, tag = 'internal scratch']
  %s0 = inlined_call_operand.hbm [shape: f32[2,4,256], index: 0, kind: input, shape index: {}]
  %s1 = inlined_call_operand.vmem [shape: f32[2,6,256], index: 1, kind: output, shape index: {}]
  %s2 = sld [smem:[#allocation0]]
  $region41: #{tpu_custom_call.1} parent=0
    _
  %s4 = ssub.s32 1, %s2
  %s5 = scalar_select 0, %s4, %s2
  $region1: #{tpu_custom_call.1} parent=0
    #allocation2 [shape = 'u8[8192]{0}', space=vmem, size = 0x2000, scoped, tag = 'input window, operand 0']
    #allocation3 [shape = 's32[2]{0}', space=sflag, size = 0x8, scoped, tag = 'scoped memory for tpu_custom_call.1']
    %6 = vsyncpa [#allocation3], 0
    %s7 = scalar_lea.sflag [#allocation3], 1
    %8 = vsyncpa %s7, 0
    loop: start=0, step=1, limit=4
    $region2: #{tpu_custom_call.1} parent=1 // loop_pre_header
      _
    $region3: #{tpu_custom_call.1} parent=1 // loop_header
      %s10 = sphi 0, %s14
      %p11 = scmp.ge.s32.totalorder %s10, 4
      %s17 = sphi 0, %s29
      %s18 = sphi 0, %s25
      %s19 = sphi 0, %s17
      %s20 = sphi 0, %s18
      %s21 = sphi 0, %s19
      %s22 = sphi 0, %s20
      %s34 = sphi 0, %s36
      %s37 = sphi 0, %s34
      %s38 = sphi 0, %s37
      %s54 = sphi 0, %s38
      %s62 = sphi 0, %s64
      %s65 = sphi 0, %s62
      %s66 = sphi 0, %s65
      %s82 = sphi 0, %s66
    $region4: #{tpu_custom_call.1} parent=1 // loop_header_branch
      %13 = sbr.rel (%p11) target = $region8
    $region5: #{tpu_custom_call.1} parent=1 // loop_body
      %s15 = ssub.s32 %s10, 1
      %s16 = ssub.s32 %s10, 2
      %s23 = sadd.s32 1, %s18
      %p24 = scmp.ge.s32.totalorder %s23, 1
      %s25 = scalar_select %p24, 0, %s23
      %s26 = sadd.s32 1, %s17
      %s27 = scalar_select %p24, %s26, %s17
      %p28 = scmp.ge.s32.totalorder %s27, 2
      %s29 = scalar_select %p28, 0, %s27
      %s30 = ssub.s32 %s17, %s29
      %s31 = ssub.s32 %s18, %s25
      %s32 = sor.u32 %s30, %s31
      %p33 = scmp.eq.s32.totalorder %s32, 0
      %s35 = sadd.s32 %s34, 1
      %s36 = scalar_select %p33, %s34, %s35
      %p39 = pneg %p33
      %p40 = scmp.eq.s32.totalorder %s10, 1
      %p41 = por %p39, %p40
      %p42 = scmp.ne.s32.totalorder %s34, %s37
      %p43 = scmp.eq.s32.totalorder %s10, 0
      %p44 = por %p42, %p43
      %p45 = scmp.ne.s32.totalorder %s34, %s37
      %p46 = scmp.eq.s32.totalorder %s15, 1
      %p47 = por %p45, %p46
      %p48 = scmp.ne.s32.totalorder %s37, %s38
      %p49 = scmp.eq.s32.totalorder %s15, 0
      %p50 = por %p48, %p49
      %p51 = scmp.ne.s32.totalorder %s37, %s38
      %p52 = scmp.eq.s32.totalorder %s16, 1
      %p53 = por %p51, %p52
      %p55 = scmp.ne.s32.totalorder %s38, %s54
      %p56 = scmp.eq.s32.totalorder %s16, 0
      %p57 = por %p55, %p56
      %s58 = ssub.s32 %s17, %s29
      %s59 = ssub.s32 %s18, %s25
      %s60 = sor.u32 %s58, %s59
      %p61 = scmp.eq.s32.totalorder %s60, 0
      %s63 = sadd.s32 %s62, 1
      %s64 = scalar_select %p61, %s62, %s63
      %p67 = pneg %p61
      %p68 = scmp.eq.s32.totalorder %s10, 1
      %p69 = por %p67, %p68
      %p70 = scmp.ne.s32.totalorder %s62, %s65
      %p71 = scmp.eq.s32.totalorder %s10, 0
      %p72 = por %p70, %p71
      %p73 = scmp.ne.s32.totalorder %s62, %s65
      %p74 = scmp.eq.s32.totalorder %s15, 1
      %p75 = por %p73, %p74
      %p76 = scmp.ne.s32.totalorder %s65, %s66
      %p77 = scmp.eq.s32.totalorder %s15, 0
      %p78 = por %p76, %p77
      %p79 = scmp.ne.s32.totalorder %s65, %s66
      %p80 = scmp.eq.s32.totalorder %s16, 1
      %p81 = por %p79, %p80
      %p83 = scmp.ne.s32.totalorder %s66, %s82
      %p84 = scmp.eq.s32.totalorder %s16, 0
      %p85 = por %p83, %p84
      %p86 = scmp.le.s32.totalorder 1, %s10
      %p87 = scmp.lt.s32.totalorder %s10, 3
      %p88 = pnand %p86, %p87
      %p89 = pneg %p88
      // Predicated region
      $region9: #{tpu_custom_call.1} parent=5 // pred_check
        _
      $region10: #{tpu_custom_call.1} parent=5 // pred_check_branch
        %91 = sbr.rel (%p88) target = $region12
      $region11: #{tpu_custom_call.1} parent=5 // pred_region
        %s92 = ssub.s32 %s10, 1
      $region12: #{tpu_custom_call.1} parent=5 // pred_fallthru
        _
      %p93 = scmp.lt.s32.totalorder %s10, 2
      // Predicated region
      $region13: #{tpu_custom_call.1} parent=5 // pred_check
        %p94 = pneg %p93
      $region14: #{tpu_custom_call.1} parent=5 // pred_check_branch
        %96 = sbr.rel (%p94) target = $region16
      $region15: #{tpu_custom_call.1} parent=5 // pred_region
        // Predicated region
        $region17: #{tpu_custom_call.1} parent=15 // pred_check
          %p97 = pneg %p44
        $region18: #{tpu_custom_call.1} parent=15 // pred_check_branch
          %99 = sbr.rel (%p97) target = $region20
        $region19: #{tpu_custom_call.1} parent=15 // pred_region
          %s100 = sand.u32 %s34, 1
          %s101 = scalar_lea.sflag [#allocation3], %s100
          %s102 = sand.u32 %s34, 1
          %s103 = smul.addr %s102, 8
          %s104 = scalar_lea.vmem [#allocation2], %s103
          %s105 = smul.u32 2, %s18
          %s107 = ssub.s32 128, 128
          %108 = vsyncadd %s101, %s107
          %s109 = smul.addr %s17, 2
          %s110 = sadd.s32 %s105, %s109
          %s111 = smul.addr %s110, 64
          %s112 = scalar_lea.hbm %s0, %s111
          %s114 = sshll.u32 %s104, 4
          %s115 = int_to_ptr.vmem [resolvable:$true] %s114
          %117 = dma.hbm_to_vmem [thread:$0]  %s112, 128, %s115, %s101
        $region20: #{tpu_custom_call.1} parent=15 // pred_fallthru
          _
      $region16: #{tpu_custom_call.1} parent=5 // pred_fallthru
        _
      %p118 = scmp.le.s32.totalorder 1, %s10
      %p119 = scmp.lt.s32.totalorder %s10, 3
      %p120 = pnand %p118, %p119
      %p121 = pneg %p120
      // Predicated region
      $region21: #{tpu_custom_call.1} parent=5 // pred_check
        _
      $region22: #{tpu_custom_call.1} parent=5 // pred_check_branch
        %123 = sbr.rel (%p120) target = $region24
      $region23: #{tpu_custom_call.1} parent=5 // pred_region
        %s124 = ssub.s32 %s10, 1
        %s125 = sand.u32 %s37, 1
        %s126 = scalar_lea.sflag [#allocation3], %s125
        %s127 = sand.u32 %s37, 1
        %s128 = smul.addr %s127, 8
        %s129 = scalar_lea.vmem [#allocation2], %s128
        // Predicated region
        $region25: #{tpu_custom_call.1} parent=23 // pred_check
          %p130 = pneg %p50
        $region26: #{tpu_custom_call.1} parent=23 // pred_check_branch
          %132 = sbr.rel (%p130) target = $region28
        $region27: #{tpu_custom_call.1} parent=23 // pred_region
          %133 = dma.done %s126, 128
        $region28: #{tpu_custom_call.1} parent=23 // pred_fallthru
          _
        %s134 = sand.u32 %s37, 1
        %s135 = scalar_lea.sflag [#allocation3], %s134
        %s136 = sand.u32 %s37, 1
        %s137 = smul.addr %s136, 8
        %s138 = scalar_lea.vmem [#allocation2], %s137
        %p139 = pneg %p50
        %p140 = pneg %p47
        %p141 = pneg %p78
        %p142 = pneg %p75
        %s143 = smul.u32 2, %s20
        %p144 = scmp.lt.s32.totalorder %s19, 1
        %s145 = scalar_select %p144, %s19, 1
        %p146 = scmp.lt.s32.totalorder %s143, 1
        %s147 = scalar_select %p146, %s143, 1
        %s148 = smul.addr %s145, 2
        %s149 = sadd.s32 %s147, %s148
        %s150 = smul.addr %s149, 8
        %s151 = scalar_lea.vmem %s1, %s150
        %s152 = smul.u32 2, %s20
        %s153 = smul.u32 2, %s20
        %p154 = scmp.lt.s32.totalorder %s19, 1
        %s155 = scalar_select %p154, %s19, 1
        %p156 = scmp.lt.s32.totalorder %s153, 1
        %s157 = scalar_select %p156, %s153, 1
        %s158 = smul.addr %s155, 2
        %s159 = sadd.s32 %s157, %s158
        %s160 = smul.addr %s159, 8
        %s161 = scalar_lea.vmem %s1, %s160
        %s162 = smul.u32 2, %s20
        %v163 = vld [vmem:[%s129] sm:$0xff]
        %v165 = vcombine.high %v163, %v163
        %167 = vst [vmem:[%s161] sm:$0xf] %v163
        %168 = vst [vmem:[%s161 + $0x8] sm:$0xf] %v165
        %s169 = smul.u32 %s20, 256
        %p170 = scmp.lt.s32.totalorder %s169, 0
        %s171 = ssub.s32 0, %s169
        %s172 = scalar_select %p170, %s171, %s169
        %s173 = sshrl.u32 %s172, 4
        %s174 = ssub.s32 0, %s173
        %s175 = scalar_select %p170, %s174, %s173
        %p176 = scmp.lt.s32.totalorder %s169, 0
        %s177 = ssub.s32 0, %s169
        %s178 = scalar_select %p176, %s177, %s169
        %s179 = sand.u32 %s178, 15
        %s180 = ssub.s32 0, %s179
        %s181 = scalar_select %p176, %s180, %s179
        %v182 = vlaneseq
        %v183 = vand.u32 %v182, 127
        %v184 = vadd.s32 %v183, 128
        %v185 = vstv %s181
        %v186 = vadd.s32 %v183, %v185
        %v187 = vadd.s32 %v184, %v185
        %v188 = vcvt.s32.f32 %v186
        %v189 = vcvt.s32.f32 %v187
        %v190 = vadd.f32 %v188, 0.5
        %v191 = vadd.f32 %v189, 0.5
        %v192 = vmul.f32 %v190, 0.0625
        %v193 = vmul.f32 %v191, 0.0625
        %v194 = vfloor.f32 %v192
        %v195 = vfloor.f32 %v193
        %v196 = vmul.f32 %v194, 16.0
        %v197 = vmul.f32 %v195, 16.0
        %vm198 = vcmp.gt.f32.partialorder %v196, %v188
        %vm199 = vcmp.gt.f32.partialorder %v197, %v189
        %v200 = vsub.f32 %v194, 1.0
        %v201 = vsub.f32 %v195, 1.0
        %v202 = vsel %vm198, %v200, %v194
        %v203 = vsel %vm199, %v201, %v195
        %v204 = vadd.f32 %v202, 1.0
        %v205 = vadd.f32 %v203, 1.0
        %v206 = vmul.f32 %v204, 16.0
        %v207 = vmul.f32 %v205, 16.0
        %vm208 = vcmp.le.f32.partialorder %v206, %v188
        %vm209 = vcmp.le.f32.partialorder %v207, %v189
        %v210 = vsel %vm208, %v204, %v202
        %v211 = vsel %vm209, %v205, %v203
        %v212 = vmul.f32 %v210, 16.0
        %v213 = vmul.f32 %v211, 16.0
        %v214 = vsub.f32 %v188, %v212
        %v215 = vsub.f32 %v189, %v213
        %s216 = scvt.s32.f32 %s175
        %v217 = vstv %s216
        %v218 = vadd.f32 %v210, %v217
        %v219 = vadd.f32 %v211, %v217
        %v220 = vmul.f32 %v218, 0.13333334
        %v221 = vmul.f32 %v219, 0.13333334
        %v222 = vsub.f32 %v220, 1.0
        %v223 = vsub.f32 %v221, 1.0
        %v224 = vmul.f32 %v214, 0.13333334
        %v225 = vmul.f32 %v215, 0.13333334
        %v226 = vsub.f32 %v224, 1.0
        %v227 = vsub.f32 %v225, 1.0
        %v228 = vlaneseq
        %v229 = vshrl.u32 %v228, 7
        %vm230 = vcmp.eq.s32.totalorder %v229, 0
        %v231 = vsel %vm230, %v222, %v226
        %v232 = vsel %vm230, %v223, %v227
        %v235 = vrot.slane %v231, 4
        %v236 = vrot.slane %v232, 4
        %239 = vst [vmem:[%s161] sm:$0x30] %v235
        %240 = vst [vmem:[%s161 + $0x8] sm:$0x30] %v236
        %s241 = smul.u32 2, %s20
        %p242 = scmp.lt.s32.totalorder %s19, 1
        %s243 = scalar_select %p242, %s19, 1
        %p244 = scmp.lt.s32.totalorder %s241, 1
        %s245 = scalar_select %p244, %s241, 1
        %s246 = smul.addr %s243, 2
        %s247 = sadd.s32 %s245, %s246
        %s248 = smul.addr %s247, 8
        %s249 = scalar_lea.vmem %s1, %s248
        // Predicated region
        $region29: #{tpu_custom_call.1} parent=23 // pred_check
          %p250 = pneg %p75
        $region30: #{tpu_custom_call.1} parent=23 // pred_check_branch
          %252 = sbr.rel (%p250) target = $region32
        $region31: #{tpu_custom_call.1} parent=23 // pred_region
          %s253 = smul.u32 2, %s20
        $region32: #{tpu_custom_call.1} parent=23 // pred_fallthru
          _
      $region24: #{tpu_custom_call.1} parent=5 // pred_fallthru
        _
      %p254 = scmp.le.s32.totalorder 2, %s10
      // Predicated region
      $region33: #{tpu_custom_call.1} parent=5 // pred_check
        %p255 = pneg %p254
      $region34: #{tpu_custom_call.1} parent=5 // pred_check_branch
        %257 = sbr.rel (%p255) target = $region36
      $region35: #{tpu_custom_call.1} parent=5 // pred_region
        %s258 = ssub.s32 %s10, 2
        // Predicated region
        $region37: #{tpu_custom_call.1} parent=35 // pred_check
          %p259 = pneg %p81
        $region38: #{tpu_custom_call.1} parent=35 // pred_check_branch
          %261 = sbr.rel (%p259) target = $region40
        $region39: #{tpu_custom_call.1} parent=35 // pred_region
          %s262 = smul.u32 2, %s22
          %p263 = scmp.lt.s32.totalorder %s21, 1
          %s264 = scalar_select %p263, %s21, 1
          %p265 = scmp.lt.s32.totalorder %s262, 1
          %s266 = scalar_select %p265, %s262, 1
          %s267 = smul.addr %s264, 2
          %s268 = sadd.s32 %s266, %s267
          %s269 = smul.addr %s268, 8
          %s270 = scalar_lea.vmem %s1, %s269
        $region40: #{tpu_custom_call.1} parent=35 // pred_fallthru
          _
      $region36: #{tpu_custom_call.1} parent=5 // pred_fallthru
        _
    $region6: #{tpu_custom_call.1} parent=1 // loop_footer
      %s14 = sadd.s32 1, %s10
    $region7: #{tpu_custom_call.1} parent=1 // loop_footer_branch
      %9 = sbr.rel target = $region3
    $region8: #{tpu_custom_call.1} parent=1 // loop_exit
      _
    %271 = vsyncpa [#allocation3], 1
    %s272 = scalar_lea.sflag [#allocation3], 1
    %273 = vsyncpa %s272, 1

</llo_original>
